<compile_context>
chip_gen: v5e
topology: v5e:2x2
jax: 0.10.0
libtpu: 0.0.40
codegen_flags: <defaults>
</compile_context>

<pallas_src>
import jax
import jax.numpy as jnp
from jax.experimental import pallas as pl
from jax.experimental.pallas import tpu as pltpu

LANE = 128      # lane width / channel & FC padding target
SUBLANE = 8     # sublane granularity for the time axis
NEG = -1.0e9    # folded validity-mask value (ReLU sends these positions to 0)


def _round_up(x, m):
    return ((x + m - 1) // m) * m


def _tpu_geometry():
    """Generation-aware tiling knobs: TensorCores per chip + scoped-VMEM budget."""
    kind = ""
    try:
        kind = jax.devices()[0].device_kind.lower()
    except Exception:
        pass
    if "v7" in kind or "7x" in kind:
        return {"n_cores": 2, "vmem_budget": 48 << 20}    # 64 MiB physical / TC
    if "v6" in kind:
        return {"n_cores": 1, "vmem_budget": 100 << 20}   # 128 MiB physical
    if "v5e" in kind or "v5 lite" in kind or "v5lite" in kind:
        return {"n_cores": 1, "vmem_budget": 100 << 20}   # 128 MiB physical
    if "v5" in kind or "v4" in kind:                      # v5p / v4 megacore
        return {"n_cores": 2, "vmem_budget": 64 << 20}
    return {"n_cores": 2, "vmem_budget": 32 << 20}        # conservative default


def _vmem_bytes(bt, Lp, Epad, Cpad, max_ks, Pout):
    rows = bt * Lp
    emb = 2 * rows * Epad * 2                  # double-buffered bf16 input tile
    y = rows * max_ks * Cpad * 4               # packed conv-matmul output (f32)
    acc = rows * Cpad * 4                      # tap-aligned accumulator (f32)
    wts = (Epad * max_ks * Cpad * 2            # single-buffered constants
           + Lp * Cpad * 4 + Cpad * Pout * 2 + Pout * 4)
    outb = 2 * bt * Pout * 4
    return emb + y + acc + wts + outb


def _pick_batch_tile(B, Lp, Epad, Cpad, max_ks, Pout, geom):
    """Largest batch tile (max MXU fill, min per-step overhead) that fits the
    generation's VMEM budget; on 2-TC parts keep the grid-step count a
    multiple of the core count so both TensorCores get work."""
    budget = int(geom["vmem_budget"] * 0.75)
    for bt in range(B, 0, -1):
        if B % bt:
            continue
        n_tiles = B // bt
        if geom["n_cores"] > 1 and B > 1 and n_tiles % geom["n_cores"] != 0:
            continue
        if _vmem_bytes(bt, Lp, Epad, Cpad, max_ks, Pout) <= budget:
            return bt
    return 1


# ---------------------------------------------------------------------------
# Fused conv(all branches) + ReLU + max-pool + FC kernel
# ---------------------------------------------------------------------------
def make_fused_kernel(bt, Lp, Cpad, max_ks):
    rows = bt * Lp

    def kernel(emb_ref, wc_ref, bm_ref, wf_ref, bf_ref, out_ref):
        # One bf16 MXU matmul computes every branch and every kernel-height
        # tap: (bt*Lp, Epad) @ (Epad, max_ks*Cpad), f32 accumulation.
        y = jnp.dot(emb_ref[...], wc_ref[...],
                    preferred_element_type=jnp.float32)        # (rows, max_ks*Cpad)

        # Align tap j onto tap 0 with an XLU sublane rotate (shift rows-j == -j,
        # i.e. out[t] = in[t+j]).  Wrapped / cross-batch rows land only on
        # positions the bias-mask already sends to -1e9, so they never survive
        # ReLU + max-pool.  Lane slices below are 128-aligned (no relayout).
        acc = y[:, 0:Cpad]
        for j in range(1, max_ks):
            tap = y[:, j * Cpad:(j + 1) * Cpad]
            acc = acc + pltpu.roll(tap, shift=rows - j, axis=0)

        # Folded conv bias + validity mask, ReLU, global max-pool (f32 VPU/XLU).
        acc = acc.reshape(bt, Lp, Cpad)
        acc = jnp.maximum(acc + bm_ref[...], 0.0)
        pooled = jnp.max(acc, axis=1)                           # (bt, Cpad)

        # FC: padded rows/cols of wf are zero, so padding never leaks.
        out = jnp.dot(pooled.astype(jnp.bfloat16), wf_ref[...],
                      preferred_element_type=jnp.float32) + bf_ref[...]
        out_ref[...] = out                                      # lane-dense store

    return kernel


def textcnn_fused_forward(token_ids, packed, *, batch_tile=None):
    """Embedding lookup (JAX glue, bf16 padded table) + fused Pallas kernel."""
    B, L = token_ids.shape
    assert L == packed["seq_len"], (L, packed["seq_len"])
    Lp, Epad, Cpad = packed["Lp"], packed["Epad"], packed["Cpad"]
    max_ks, Pout = packed["max_ks"], packed["Pout"]

    if Lp > L:  # pad time axis to a sublane multiple; padded rows are masked
        token_ids = jnp.pad(token_ids, ((0, 0), (0, Lp - L)))
    emb = jnp.take(packed["embedding"], token_ids, axis=0)      # (B, Lp, Epad) bf16
    emb2d = emb.reshape(B * Lp, Epad)

    geom = _tpu_geometry()
    bt = batch_tile or _pick_batch_tile(B, Lp, Epad, Cpad, max_ks, Pout, geom)
    assert B % bt == 0, (B, bt)
    n_tiles = B // bt

    const = dict(pipeline_mode=pl.Buffered(1))   # fetched once -> single-buffer
    kernel = make_fused_kernel(bt, Lp, Cpad, max_ks)
    out = pl.pallas_call(
        kernel,
        out_shape=jax.ShapeDtypeStruct((n_tiles, bt, Pout), jnp.float32),
        grid=(n_tiles,),
        in_specs=[
            pl.BlockSpec((bt * Lp, Epad), lambda i: (i, 0)),              # emb tile
            pl.BlockSpec((Epad, max_ks * Cpad), lambda i: (0, 0), **const),  # conv W
            pl.BlockSpec((Lp, Cpad), lambda i: (0, 0), **const),          # bias+mask
            pl.BlockSpec((Cpad, Pout), lambda i: (0, 0), **const),        # FC W
            pl.BlockSpec((1, Pout), lambda i: (0, 0), **const),           # FC bias
        ],
        out_specs=pl.BlockSpec((None, bt, Pout), lambda i: (i, 0, 0)),
        compiler_params=pltpu.CompilerParams(
            dimension_semantics=("parallel",),
            vmem_limit_bytes=geom["vmem_budget"]),
    )(emb2d, packed["wc"], packed["biasmask"], packed["wf"], packed["bf"])

    out = out.reshape(B, Pout)
    return out[:, :packed["output_size"]]


# ---------------------------------------------------------------------------
# One-time parameter packing (outside the hot path)
# ---------------------------------------------------------------------------
def pack_params(params, seq_len):
    conv_w, conv_b = params["conv_w"], params["conv_b"]
    kernel_sizes = [int(w.shape[0]) for w in conv_w]
    E = int(conv_w[0].shape[1])
    C = int(conv_w[0].shape[2])
    n_branch = len(conv_w)
    max_ks = max(kernel_sizes)
    assert seq_len >= max_ks, (
        f"seq_len={seq_len} shorter than largest conv kernel {max_ks}")

    L = seq_len
    Lp = _round_up(L, SUBLANE)
    Epad = _round_up(max(E, LANE), LANE)
    Cpad = _round_up(max(n_branch * C, LANE), LANE)
    output_size = int(params["fc_w"].shape[1])
    Pout = _round_up(max(output_size, LANE), LANE)

    # Packed conv weights: tap j lives in lanes [j*Cpad, (j+1)*Cpad); padded
    # embedding rows / channels are zero.  Stored bf16 for the MXU.
    wc = jnp.zeros((max_ks, Epad, Cpad), jnp.float32)
    # Bias-mask: conv bias on valid positions, -1e9 on invalid / padded ones.
    biasmask = jnp.full((Lp, Cpad), NEG, jnp.float32)
    for i, (w, b, ks) in enumerate(zip(conv_w, conv_b, kernel_sizes)):
        lo, hi = i * C, (i + 1) * C
        wc = wc.at[:ks, :E, lo:hi].set(w.astype(jnp.float32))
        biasmask = biasmask.at[:L - ks + 1, lo:hi].set(b[0].astype(jnp.float32))
    wc = jnp.transpose(wc, (1, 0, 2)).reshape(Epad, max_ks * Cpad)
    wc = wc.astype(jnp.bfloat16)

    wf = jnp.zeros((Cpad, Pout), jnp.float32)
    wf = wf.at[:n_branch * C, :output_size].set(params["fc_w"].astype(jnp.float32))
    wf = wf.astype(jnp.bfloat16)
    bf = jnp.zeros((1, Pout), jnp.float32)
    bf = bf.at[0, :output_size].set(params["fc_b"][0].astype(jnp.float32))

    vocab = params["embedding"].shape[0]
    emb_tab = jnp.zeros((vocab, Epad), jnp.float32)
    emb_tab = emb_tab.at[:, :E].set(params["embedding"].astype(jnp.float32))
    emb_tab = emb_tab.astype(jnp.bfloat16)   # halves gather + kernel-input HBM traffic

    return dict(embedding=emb_tab, wc=wc, biasmask=biasmask, wf=wf, bf=bf,
                output_size=output_size, seq_len=L, Lp=Lp, Epad=Epad,
                Cpad=Cpad, max_ks=max_ks, Pout=Pout)


# ---------------------------------------------------------------------------
# Pure-JAX f32 reference for correctness checking
# ---------------------------------------------------------------------------
def reference_forward(token_ids, params):
    emb = params["embedding"][token_ids]
    feats = []
    for w, b in zip(params["conv_w"], params["conv_b"]):
        ks = w.shape[0]
        Lout = emb.shape[1] - ks + 1
        windows = jnp.stack([emb[:, j:j + Lout, :] for j in range(ks)], axis=2)
        conv = jnp.einsum("blke,kec->blc", windows, w) + b[0]
        conv = jnp.maximum(conv, 0.0)
        feats.append(jnp.max(conv, axis=1))
    feat = jnp.concatenate(feats, axis=1)
    # nn.Dropout is identity in eval mode.
    return feat @ params["fc_w"] + params["fc_b"][0]


# ---------------------------------------------------------------------------
# Deterministic parameter init + smoke test
# ---------------------------------------------------------------------------
def init_params(key, vocab_size, embedding_size, c_out, kernel_sizes, output_size):
    keys = jax.random.split(key, 2 + 2 * len(kernel_sizes) + 2)
    ki = iter(keys)
    params = {
        "embedding": jax.random.normal(next(ki), (vocab_size, embedding_size),
                                       jnp.float32) * 0.1,
        "conv_w": [],
        "conv_b": [],
    }
    for ks in kernel_sizes:
        params["conv_w"].append(
            jax.random.normal(next(ki), (ks, embedding_size, c_out), jnp.float32) * 0.1)
        params["conv_b"].append(
            jax.random.normal(next(ki), (1, c_out), jnp.float32) * 0.1)
    fin = len(kernel_sizes) * c_out
    params["fc_w"] = jax.random.normal(next(ki), (fin, output_size), jnp.float32) * 0.1
    params["fc_b"] = jax.random.normal(next(ki), (1, output_size), jnp.float32) * 0.1
    return params


if __name__ == "__main__":
    # Small, module-consistent shapes.
    B, L = 2, 16                 # batch, sequence length (token ids)
    vocab_size = 50
    embedding_size = 32
    c_out = 4
    kernel_sizes = (2, 3, 4)
    output_size = 8

    key = jax.random.PRNGKey(0)
    k_tok, k_par = jax.random.split(key)
    token_ids = jax.random.randint(k_tok, (B, L), 0, vocab_size, dtype=jnp.int32)
    params = init_params(k_par, vocab_size, embedding_size, c_out,
                         kernel_sizes, output_size)
    packed = pack_params(params, seq_len=L)

    out = textcnn_fused_forward(token_ids, packed)
    out = jax.block_until_ready(out)

    ref = reference_forward(token_ids, params)
    assert out.shape == (B, output_size), out.shape
    # bf16 MXU operands vs f32 reference -> bf16-level tolerance.
    assert jnp.allclose(out, ref, atol=3e-2, rtol=3e-2), (out, ref)

    print("KERNEL_OK")
</pallas_src>

<mosaic_0001>
module attributes {stable_mosaic.version = 11 : i64} {
  func.func @kernel(%arg0: i32, %arg1: memref<16x128xbf16, #tpu.memory_space<vmem>>, %arg2: memref<128x512xbf16, #tpu.memory_space<vmem>>, %arg3: memref<16x128xf32, #tpu.memory_space<vmem>>, %arg4: memref<128x128xbf16, #tpu.memory_space<vmem>>, %arg5: memref<1x128xf32, #tpu.memory_space<vmem>>, %arg6: memref<1x1x128xf32, #tpu.memory_space<vmem>>) attributes {dimension_semantics = [#tpu.dimension_semantics<parallel>], iteration_bounds = array<i64: 2>, scalar_prefetch = 0 : i64, scratch_operands = 0 : i64, tpu.core_type = #tpu.core_type<tc>, window_params = [{transform_indices = @transform_0, window_bounds = array<i64: 16, 128>}, {pipeline_mode = #tpu.pipeline_mode<synchronous>, transform_indices = @transform_1, window_bounds = array<i64: 128, 512>}, {pipeline_mode = #tpu.pipeline_mode<synchronous>, transform_indices = @transform_2, window_bounds = array<i64: 16, 128>}, {pipeline_mode = #tpu.pipeline_mode<synchronous>, transform_indices = @transform_3, window_bounds = array<i64: 128, 128>}, {pipeline_mode = #tpu.pipeline_mode<synchronous>, transform_indices = @transform_4, window_bounds = array<i64: 1, 128>}, {transform_indices = @transform_5, window_bounds = array<i64: 1, 1, 128>}]} {
    %c0 = arith.constant 0 : index
    %c0_0 = arith.constant 0 : index
    %0 = vector.load %arg1[%c0, %c0_0] : memref<16x128xbf16, #tpu.memory_space<vmem>>, vector<16x128xbf16>
    %c0_1 = arith.constant 0 : index
    %c0_2 = arith.constant 0 : index
    %1 = vector.load %arg2[%c0_1, %c0_2] : memref<128x512xbf16, #tpu.memory_space<vmem>>, vector<128x512xbf16>
    %cst = arith.constant dense<0.000000e+00> : vector<16x512xf32>
    %2 = tpu.matmul %0, %1, %cst {dimension_numbers = #tpu.dot_dimension_numbers<[1], [0], [0], [1], [0, 0, 1, 1], [], []>} : vector<16x128xbf16>, vector<128x512xbf16>, vector<16x512xf32> -> vector<16x512xf32>
    %3 = vector.extract_strided_slice %2 {offsets = [0, 0], sizes = [16, 128], strides = [1, 1]} : vector<16x512xf32> to vector<16x128xf32>
    %4 = vector.extract_strided_slice %2 {offsets = [0, 128], sizes = [16, 128], strides = [1, 1]} : vector<16x512xf32> to vector<16x128xf32>
    %c15_i32 = arith.constant 15 : i32
    %5 = tpu.dynamic_rotate %4 by %c15_i32 dim 0 : vector<16x128xf32>, i32 -> vector<16x128xf32>
    %6 = arith.addf %3, %5 : vector<16x128xf32>
    %7 = vector.extract_strided_slice %2 {offsets = [0, 256], sizes = [16, 128], strides = [1, 1]} : vector<16x512xf32> to vector<16x128xf32>
    %c14_i32 = arith.constant 14 : i32
    %8 = tpu.dynamic_rotate %7 by %c14_i32 dim 0 : vector<16x128xf32>, i32 -> vector<16x128xf32>
    %9 = arith.addf %6, %8 : vector<16x128xf32>
    %10 = vector.extract_strided_slice %2 {offsets = [0, 384], sizes = [16, 128], strides = [1, 1]} : vector<16x512xf32> to vector<16x128xf32>
    %c13_i32 = arith.constant 13 : i32
    %11 = tpu.dynamic_rotate %10 by %c13_i32 dim 0 : vector<16x128xf32>, i32 -> vector<16x128xf32>
    %12 = arith.addf %9, %11 : vector<16x128xf32>
    %13 = vector.shape_cast %12 : vector<16x128xf32> to vector<1x16x128xf32>
    %c0_3 = arith.constant 0 : index
    %c0_4 = arith.constant 0 : index
    %14 = vector.load %arg3[%c0_3, %c0_4] : memref<16x128xf32, #tpu.memory_space<vmem>>, vector<16x128xf32>
    %15 = vector.shape_cast %14 : vector<16x128xf32> to vector<1x16x128xf32>
    %16 = arith.addf %13, %15 : vector<1x16x128xf32>
    %cst_5 = arith.constant 0.000000e+00 : f32
    %17 = vector.broadcast %cst_5 : f32 to vector<1x16x128xf32>
    %18 = arith.maximumf %16, %17 : vector<1x16x128xf32>
    %cst_6 = arith.constant dense<0xFF800000> : vector<1x128xf32>
    %19 = vector.multi_reduction <maximumf>, %18, %cst_6 [1] : vector<1x16x128xf32> to vector<1x128xf32>
    %20 = arith.truncf %19 : vector<1x128xf32> to vector<1x128xbf16>
    %c0_7 = arith.constant 0 : index
    %c0_8 = arith.constant 0 : index
    %21 = vector.load %arg4[%c0_7, %c0_8] : memref<128x128xbf16, #tpu.memory_space<vmem>>, vector<128x128xbf16>
    %cst_9 = arith.constant dense<0.000000e+00> : vector<1x128xf32>
    %22 = tpu.matmul %20, %21, %cst_9 {dimension_numbers = #tpu.dot_dimension_numbers<[1], [0], [0], [1], [0, 0, 1, 1], [], []>} : vector<1x128xbf16>, vector<128x128xbf16>, vector<1x128xf32> -> vector<1x128xf32>
    %c0_10 = arith.constant 0 : index
    %c0_11 = arith.constant 0 : index
    %23 = vector.load %arg5[%c0_10, %c0_11] : memref<1x128xf32, #tpu.memory_space<vmem>>, vector<1x128xf32>
    %24 = arith.addf %22, %23 : vector<1x128xf32>
    %c0_12 = arith.constant 0 : index
    %c0_13 = arith.constant 0 : index
    %c0_14 = arith.constant 0 : index
    %25 = vector.load %arg6[%c0_12, %c0_13, %c0_14] : memref<1x1x128xf32, #tpu.memory_space<vmem>>, vector<1x1x128xf32>
    %26 = vector.shape_cast %25 : vector<1x1x128xf32> to vector<1x128xf32>
    %27 = vector.shape_cast %24 : vector<1x128xf32> to vector<1x1x128xf32>
    tpu.vector_store %arg6[%c0_12, %c0_13, %c0_14], %27 {strides = array<i32>} : memref<1x1x128xf32, #tpu.memory_space<vmem>>, vector<1x1x128xf32>,
    return
  }
  func.func @transform_0(%arg0: i32) -> (i32, i32) {
    %c0_i32 = arith.constant 0 : i32
    %c0_i32_0 = arith.constant 0 : i32
    return %arg0, %c0_i32 : i32, i32
  }
  func.func @transform_1(%arg0: i32) -> (i32, i32) {
    %c0_i32 = arith.constant 0 : i32
    %c0_i32_0 = arith.constant 0 : i32
    %c0_i32_1 = arith.constant 0 : i32
    return %c0_i32, %c0_i32_0 : i32, i32
  }
  func.func @transform_2(%arg0: i32) -> (i32, i32) {
    %c0_i32 = arith.constant 0 : i32
    %c0_i32_0 = arith.constant 0 : i32
    %c0_i32_1 = arith.constant 0 : i32
    return %c0_i32, %c0_i32_0 : i32, i32
  }
  func.func @transform_3(%arg0: i32) -> (i32, i32) {
    %c0_i32 = arith.constant 0 : i32
    %c0_i32_0 = arith.constant 0 : i32
    %c0_i32_1 = arith.constant 0 : i32
    return %c0_i32, %c0_i32_0 : i32, i32
  }
  func.func @transform_4(%arg0: i32) -> (i32, i32) {
    %c0_i32 = arith.constant 0 : i32
    %c0_i32_0 = arith.constant 0 : i32
    %c0_i32_1 = arith.constant 0 : i32
    return %c0_i32, %c0_i32_0 : i32, i32
  }
  func.func @transform_5(%arg0: i32) -> (i32, i32, i32) {
    %c0_i32 = arith.constant 0 : i32
    %c0_i32_0 = arith.constant 0 : i32
    %c0_i32_1 = arith.constant 0 : i32
    return %arg0, %c0_i32, %c0_i32_0 : i32, i32, i32
  }
}

</mosaic_0001>

<llo_original>
// kernel: tpu_custom_call.1
$region0: #{tpu_custom_call.1}
  #allocation0 [shape = 'u32[]', space=smem, size = 0x4, offset = 0x4, fixed_abs, tag = 'smem constant byte address 0x4 - core index']
  #allocation1 [shape = 'u32[72,128]{1,0:T(1,128)}', space=vmem, size = 0x9000, scoped, tag = 'internal scratch']
  %s0 = inlined_call_operand.hbm [shape: bf16[32,128], index: 0, kind: input, shape index: {}]
  %s1 = inlined_call_operand.hbm [shape: bf16[128,512], index: 1, kind: input, shape index: {}]
  %s2 = inlined_call_operand.hbm [shape: f32[16,128], index: 2, kind: input, shape index: {}]
  %s3 = inlined_call_operand.hbm [shape: bf16[128,128], index: 3, kind: input, shape index: {}]
  %s4 = inlined_call_operand.vmem [shape: f32[1,128], index: 4, kind: input, shape index: {}]
  %s5 = inlined_call_operand.hbm [shape: f32[2,1,128], index: 5, kind: output, shape index: {}]
  %s6 = sld [smem:[#allocation0]]
  $region69: #{tpu_custom_call.1} parent=0
    _
  %s8 = ssub.s32 1, %s6
  %s9 = scalar_select 0, %s8, %s6
  $region1: #{tpu_custom_call.1} parent=0
    #allocation2 [shape = 'u8[8192]{0}', space=vmem, size = 0x2000, scoped, tag = 'input window, operand 0']
    #allocation3 [shape = 's32[2]{0}', space=sflag, size = 0x8, scoped, tag = 'scoped memory for tpu_custom_call.1']
    #allocation4 [shape = 's32[2]{0}', space=sflag, size = 0x8, scoped, tag = 'scoped memory for tpu_custom_call.1']
    #allocation5 [shape = 'u8[131072]{0}', space=vmem, size = 0x20000, scoped, tag = 'input window, operand 1, single buffered']
    #allocation6 [shape = 's32[1]{0}', space=sflag, size = 0x4, scoped, tag = 'scoped memory for tpu_custom_call.1']
    #allocation7 [shape = 'u8[8192]{0}', space=vmem, size = 0x2000, scoped, tag = 'input window, operand 2, single buffered']
    #allocation8 [shape = 'u8[32768]{0}', space=vmem, size = 0x8000, scoped, tag = 'input window, operand 3, single buffered']
    #allocation9 [shape = 's32[1]{0}', space=sflag, size = 0x4, scoped, tag = 'scoped memory for tpu_custom_call.1']
    #allocation10 [shape = 'u8[1024]{0}', space=vmem, size = 0x400, scoped, tag = 'output window, operand 0']
    %10 = vsyncpa [#allocation3], 0
    %s11 = scalar_lea.sflag [#allocation3], 1
    %12 = vsyncpa %s11, 0
    %13 = vsyncpa [#allocation6], 0
    %14 = vsyncpa [#allocation9], 0
    %15 = vsyncpa [#allocation4], 0
    %s16 = scalar_lea.sflag [#allocation4], 1
    %17 = vsyncpa %s16, 0
    loop: start=0, step=1, limit=4
    $region2: #{tpu_custom_call.1} parent=1 // loop_pre_header
      _
    $region3: #{tpu_custom_call.1} parent=1 // loop_header
      %s19 = sphi 0, %s23
      %p20 = scmp.ge.s32.totalorder %s19, 4
      %s29 = sphi 0, %s31
      %s32 = sphi 0, %s29
      %s33 = sphi 0, %s32
      %s49 = sphi 0, %s33
      %s53 = sphi 0, %s53
      %s55 = sphi 0, %s53
      %s56 = sphi 0, %s55
      %s70 = sphi 0, %s56
      %s74 = sphi 0, %s74
      %s76 = sphi 0, %s74
      %s77 = sphi 0, %s76
      %s91 = sphi 0, %s77
      %s95 = sphi 0, %s95
      %s97 = sphi 0, %s95
      %s98 = sphi 0, %s97
      %s112 = sphi 0, %s98
      %s116 = sphi 0, %s116
      %s118 = sphi 0, %s116
      %s119 = sphi 0, %s118
      %s133 = sphi 0, %s119
      %s139 = sphi 0, %s141
      %s142 = sphi 0, %s139
      %s143 = sphi 0, %s142
      %s159 = sphi 0, %s143
    $region4: #{tpu_custom_call.1} parent=1 // loop_header_branch
      %22 = sbr.rel (%p20) target = $region8
    $region5: #{tpu_custom_call.1} parent=1 // loop_body
      %s24 = ssub.s32 %s19, 1
      %s25 = ssub.s32 %s19, 2
      %s26 = sadd.s32 %s19, 1
      %s27 = ssub.s32 %s19, %s26
      %p28 = scmp.eq.s32.totalorder %s27, 0
      %s30 = sadd.s32 %s29, 1
      %s31 = scalar_select %p28, %s29, %s30
      %p34 = pneg %p28
      %p35 = scmp.eq.s32.totalorder %s19, 1
      %p36 = por %p34, %p35
      %p37 = scmp.ne.s32.totalorder %s29, %s32
      %p38 = scmp.eq.s32.totalorder %s19, 0
      %p39 = por %p37, %p38
      %p40 = scmp.ne.s32.totalorder %s29, %s32
      %p41 = scmp.eq.s32.totalorder %s24, 1
      %p42 = por %p40, %p41
      %p43 = scmp.ne.s32.totalorder %s32, %s33
      %p44 = scmp.eq.s32.totalorder %s24, 0
      %p45 = por %p43, %p44
      %p46 = scmp.ne.s32.totalorder %s32, %s33
      %p47 = scmp.eq.s32.totalorder %s25, 1
      %p48 = por %p46, %p47
      %p50 = scmp.ne.s32.totalorder %s33, %s49
      %p51 = scmp.eq.s32.totalorder %s25, 0
      %p52 = por %p50, %p51
      %s54 = sadd.s32 %s53, 1
      %p57 = scmp.eq.s32.totalorder %s19, 1
      %p58 = scmp.ne.s32.totalorder %s53, %s55
      %p59 = scmp.eq.s32.totalorder %s19, 0
      %p60 = por %p58, %p59
      %p61 = scmp.ne.s32.totalorder %s53, %s55
      %p62 = scmp.eq.s32.totalorder %s24, 1
      %p63 = por %p61, %p62
      %p64 = scmp.ne.s32.totalorder %s55, %s56
      %p65 = scmp.eq.s32.totalorder %s24, 0
      %p66 = por %p64, %p65
      %p67 = scmp.ne.s32.totalorder %s55, %s56
      %p68 = scmp.eq.s32.totalorder %s25, 1
      %p69 = por %p67, %p68
      %p71 = scmp.ne.s32.totalorder %s56, %s70
      %p72 = scmp.eq.s32.totalorder %s25, 0
      %p73 = por %p71, %p72
      %s75 = sadd.s32 %s74, 1
      %p78 = scmp.eq.s32.totalorder %s19, 1
      %p79 = scmp.ne.s32.totalorder %s74, %s76
      %p80 = scmp.eq.s32.totalorder %s19, 0
      %p81 = por %p79, %p80
      %p82 = scmp.ne.s32.totalorder %s74, %s76
      %p83 = scmp.eq.s32.totalorder %s24, 1
      %p84 = por %p82, %p83
      %p85 = scmp.ne.s32.totalorder %s76, %s77
      %p86 = scmp.eq.s32.totalorder %s24, 0
      %p87 = por %p85, %p86
      %p88 = scmp.ne.s32.totalorder %s76, %s77
      %p89 = scmp.eq.s32.totalorder %s25, 1
      %p90 = por %p88, %p89
      %p92 = scmp.ne.s32.totalorder %s77, %s91
      %p93 = scmp.eq.s32.totalorder %s25, 0
      %p94 = por %p92, %p93
      %s96 = sadd.s32 %s95, 1
      %p99 = scmp.eq.s32.totalorder %s19, 1
      %p100 = scmp.ne.s32.totalorder %s95, %s97
      %p101 = scmp.eq.s32.totalorder %s19, 0
      %p102 = por %p100, %p101
      %p103 = scmp.ne.s32.totalorder %s95, %s97
      %p104 = scmp.eq.s32.totalorder %s24, 1
      %p105 = por %p103, %p104
      %p106 = scmp.ne.s32.totalorder %s97, %s98
      %p107 = scmp.eq.s32.totalorder %s24, 0
      %p108 = por %p106, %p107
      %p109 = scmp.ne.s32.totalorder %s97, %s98
      %p110 = scmp.eq.s32.totalorder %s25, 1
      %p111 = por %p109, %p110
      %p113 = scmp.ne.s32.totalorder %s98, %s112
      %p114 = scmp.eq.s32.totalorder %s25, 0
      %p115 = por %p113, %p114
      %s117 = sadd.s32 %s116, 1
      %p120 = scmp.eq.s32.totalorder %s19, 1
      %p121 = scmp.ne.s32.totalorder %s116, %s118
      %p122 = scmp.eq.s32.totalorder %s19, 0
      %p123 = por %p121, %p122
      %p124 = scmp.ne.s32.totalorder %s116, %s118
      %p125 = scmp.eq.s32.totalorder %s24, 1
      %p126 = por %p124, %p125
      %p127 = scmp.ne.s32.totalorder %s118, %s119
      %p128 = scmp.eq.s32.totalorder %s24, 0
      %p129 = por %p127, %p128
      %p130 = scmp.ne.s32.totalorder %s118, %s119
      %p131 = scmp.eq.s32.totalorder %s25, 1
      %p132 = por %p130, %p131
      %p134 = scmp.ne.s32.totalorder %s119, %s133
      %p135 = scmp.eq.s32.totalorder %s25, 0
      %p136 = por %p134, %p135
      %s137 = ssub.s32 %s19, %s26
      %p138 = scmp.eq.s32.totalorder %s137, 0
      %s140 = sadd.s32 %s139, 1
      %s141 = scalar_select %p138, %s139, %s140
      %p144 = pneg %p138
      %p145 = scmp.eq.s32.totalorder %s19, 1
      %p146 = por %p144, %p145
      %p147 = scmp.ne.s32.totalorder %s139, %s142
      %p148 = scmp.eq.s32.totalorder %s19, 0
      %p149 = por %p147, %p148
      %p150 = scmp.ne.s32.totalorder %s139, %s142
      %p151 = scmp.eq.s32.totalorder %s24, 1
      %p152 = por %p150, %p151
      %p153 = scmp.ne.s32.totalorder %s142, %s143
      %p154 = scmp.eq.s32.totalorder %s24, 0
      %p155 = por %p153, %p154
      %p156 = scmp.ne.s32.totalorder %s142, %s143
      %p157 = scmp.eq.s32.totalorder %s25, 1
      %p158 = por %p156, %p157
      %p160 = scmp.ne.s32.totalorder %s143, %s159
      %p161 = scmp.eq.s32.totalorder %s25, 0
      %p162 = por %p160, %p161
      %p163 = scmp.le.s32.totalorder 1, %s19
      %p164 = scmp.lt.s32.totalorder %s19, 3
      %p165 = pnand %p163, %p164
      %p166 = pneg %p165
      // Predicated region
      $region9: #{tpu_custom_call.1} parent=5 // pred_check
        _
      $region10: #{tpu_custom_call.1} parent=5 // pred_check_branch
        %168 = sbr.rel (%p165) target = $region12
      $region11: #{tpu_custom_call.1} parent=5 // pred_region
        %s169 = ssub.s32 %s19, 1
        // Predicated region
        $region13: #{tpu_custom_call.1} parent=11 // pred_check
          %p170 = pneg %p66
        $region14: #{tpu_custom_call.1} parent=11 // pred_check_branch
          %172 = sbr.rel (%p170) target = $region16
        $region15: #{tpu_custom_call.1} parent=11 // pred_region
          %174 = vsyncadd [#allocation6], 0
          %s175 = sshll.u32 %s1, 4
          %s176 = int_to_ptr.hbm [resolvable:$true] %s175
          %s177 = sshll.u32 [#allocation5], 4
          %s178 = int_to_ptr.vmem [resolvable:$true] %s177
          %183 = dma.hbm_to_vmem [thread:$0]  %s176, 4096, %s178, [#allocation6], 256, 256, 16
        $region16: #{tpu_custom_call.1} parent=11 // pred_fallthru
          _
        // Predicated region
        $region17: #{tpu_custom_call.1} parent=11 // pred_check
          %p184 = pneg %p87
        $region18: #{tpu_custom_call.1} parent=11 // pred_check_branch
          %186 = sbr.rel (%p184) target = $region20
        $region19: #{tpu_custom_call.1} parent=11 // pred_region
          %188 = vsyncadd [#allocation6], 0
          %s189 = sshll.u32 %s2, 4
          %s190 = int_to_ptr.hbm [resolvable:$true] %s189
          %s191 = sshll.u32 [#allocation7], 4
          %s192 = int_to_ptr.vmem [resolvable:$true] %s191
          %197 = dma.hbm_to_vmem [thread:$0]  %s190, 256, %s192, [#allocation6], 128, 128, 8
        $region20: #{tpu_custom_call.1} parent=11 // pred_fallthru
          _
        // Predicated region
        $region21: #{tpu_custom_call.1} parent=11 // pred_check
          %p198 = pneg %p108
        $region22: #{tpu_custom_call.1} parent=11 // pred_check_branch
          %200 = sbr.rel (%p198) target = $region24
        $region23: #{tpu_custom_call.1} parent=11 // pred_region
          %202 = vsyncadd [#allocation9], 0
          %s203 = sshll.u32 %s3, 4
          %s204 = int_to_ptr.hbm [resolvable:$true] %s203
          %s205 = sshll.u32 [#allocation8], 4
          %s206 = int_to_ptr.vmem [resolvable:$true] %s205
          %211 = dma.hbm_to_vmem [thread:$0]  %s204, 1024, %s206, [#allocation9], 64, 64, 4
        $region24: #{tpu_custom_call.1} parent=11 // pred_fallthru
          _
        // Predicated region
        $region25: #{tpu_custom_call.1} parent=11 // pred_check
          %p212 = pneg %p129
        $region26: #{tpu_custom_call.1} parent=11 // pred_check_branch
          %214 = sbr.rel (%p212) target = $region28
        $region27: #{tpu_custom_call.1} parent=11 // pred_region
          _
        $region28: #{tpu_custom_call.1} parent=11 // pred_fallthru
          _
      $region12: #{tpu_custom_call.1} parent=5 // pred_fallthru
        _
      %p215 = scmp.lt.s32.totalorder %s19, 2
      // Predicated region
      $region29: #{tpu_custom_call.1} parent=5 // pred_check
        %p216 = pneg %p215
      $region30: #{tpu_custom_call.1} parent=5 // pred_check_branch
        %218 = sbr.rel (%p216) target = $region32
      $region31: #{tpu_custom_call.1} parent=5 // pred_region
        // Predicated region
        $region33: #{tpu_custom_call.1} parent=31 // pred_check
          %p219 = pneg %p39
        $region34: #{tpu_custom_call.1} parent=31 // pred_check_branch
          %221 = sbr.rel (%p219) target = $region36
        $region35: #{tpu_custom_call.1} parent=31 // pred_region
          %s222 = sand.u32 %s29, 1
          %s223 = scalar_lea.sflag [#allocation3], %s222
          %s224 = sand.u32 %s29, 1
          %s225 = smul.addr %s224, 8
          %s226 = scalar_lea.vmem [#allocation2], %s225
          %s227 = smul.u32 2, %s19
          %229 = vsyncadd %s223, 0
          %s230 = smul.addr %s227, 4
          %s231 = scalar_lea.hbm %s0, %s230
          %s232 = sshll.u32 %s231, 4
          %s233 = int_to_ptr.hbm [resolvable:$true] %s232
          %s234 = sshll.u32 %s226, 4
          %s235 = int_to_ptr.vmem [resolvable:$true] %s234
          %240 = dma.hbm_to_vmem [thread:$0]  %s233, 128, %s235, %s223, 64, 64, 4
        $region36: #{tpu_custom_call.1} parent=31 // pred_fallthru
          _
      $region32: #{tpu_custom_call.1} parent=5 // pred_fallthru
        _
      %p241 = scmp.le.s32.totalorder 1, %s19
      %p242 = scmp.lt.s32.totalorder %s19, 3
      %p243 = pnand %p241, %p242
      %p244 = pneg %p243
      // Predicated region
      $region37: #{tpu_custom_call.1} parent=5 // pred_check
        _
      $region38: #{tpu_custom_call.1} parent=5 // pred_check_branch
        %246 = sbr.rel (%p243) target = $region40
      $region39: #{tpu_custom_call.1} parent=5 // pred_region
        %s247 = ssub.s32 %s19, 1
        %s248 = sand.u32 %s32, 1
        %s249 = scalar_lea.sflag [#allocation3], %s248
        %s250 = sand.u32 %s32, 1
        %s251 = smul.addr %s250, 8
        %s252 = scalar_lea.vmem [#allocation2], %s251
        // Predicated region
        $region41: #{tpu_custom_call.1} parent=39 // pred_check
          %p253 = pneg %p45
        $region42: #{tpu_custom_call.1} parent=39 // pred_check_branch
          %255 = sbr.rel (%p253) target = $region44
        $region43: #{tpu_custom_call.1} parent=39 // pred_region
          %257 = dma.done %s249, 128
        $region44: #{tpu_custom_call.1} parent=39 // pred_fallthru
          _
        // Predicated region
        $region45: #{tpu_custom_call.1} parent=39 // pred_check
          %p258 = pneg %p66
        $region46: #{tpu_custom_call.1} parent=39 // pred_check_branch
          %260 = sbr.rel (%p258) target = $region48
        $region47: #{tpu_custom_call.1} parent=39 // pred_region
          %262 = dma.done [#allocation6], 4096
        $region48: #{tpu_custom_call.1} parent=39 // pred_fallthru
          _
        // Predicated region
        $region49: #{tpu_custom_call.1} parent=39 // pred_check
          %p263 = pneg %p87
        $region50: #{tpu_custom_call.1} parent=39 // pred_check_branch
          %265 = sbr.rel (%p263) target = $region52
        $region51: #{tpu_custom_call.1} parent=39 // pred_region
          %267 = dma.done [#allocation6], 256
        $region52: #{tpu_custom_call.1} parent=39 // pred_fallthru
          _
        // Predicated region
        $region53: #{tpu_custom_call.1} parent=39 // pred_check
          %p268 = pneg %p108
        $region54: #{tpu_custom_call.1} parent=39 // pred_check_branch
          %270 = sbr.rel (%p268) target = $region56
        $region55: #{tpu_custom_call.1} parent=39 // pred_region
          %272 = dma.done [#allocation9], 1024
        $region56: #{tpu_custom_call.1} parent=39 // pred_fallthru
          _
        %s273 = sand.u32 %s32, 1
        %s274 = scalar_lea.sflag [#allocation3], %s273
        %s275 = sand.u32 %s32, 1
        %s276 = smul.addr %s275, 8
        %s277 = scalar_lea.vmem [#allocation2], %s276
        %p278 = pneg %p45
        %p279 = pneg %p42
        %p280 = pneg %p66
        %p281 = pneg %p63
        %p282 = pneg %p87
        %p283 = pneg %p84
        %p284 = pneg %p108
        %p285 = pneg %p105
        %p286 = pneg %p129
        %p287 = pneg %p126
        %p288 = pneg %p155
        %p289 = pneg %p152
        %s290 = sand.u32 %s142, 1
        %s291 = scalar_lea.sflag [#allocation4], %s290
        %s292 = sand.u32 %s142, 1
        %s293 = scalar_lea.vmem [#allocation10], %s292
        %s294 = smul.u32 2, %s24
        %v295 = vld [vmem:[%s252] sm:$0xf]
        %v296 = vld [vmem:[%s252 + $0x4] sm:$0xf]
        %v297 = vld [vmem:[#allocation5] sm:$0xff]
        %v298 = vld [vmem:[#allocation5 + $0x8] sm:$0xff]
        %v299 = vld [vmem:[#allocation5 + $0x10] sm:$0xff]
        %v300 = vld [vmem:[#allocation5 + $0x18] sm:$0xff]
        %v301 = vld [vmem:[#allocation5 + $0x20] sm:$0xff]
        %v302 = vld [vmem:[#allocation5 + $0x28] sm:$0xff]
        %v303 = vld [vmem:[#allocation5 + $0x30] sm:$0xff]
        %v304 = vld [vmem:[#allocation5 + $0x38] sm:$0xff]
        %v305 = vld [vmem:[#allocation5 + $0x40] sm:$0xff]
        %v306 = vld [vmem:[#allocation5 + $0x48] sm:$0xff]
        %v307 = vld [vmem:[#allocation5 + $0x50] sm:$0xff]
        %v308 = vld [vmem:[#allocation5 + $0x58] sm:$0xff]
        %v309 = vld [vmem:[#allocation5 + $0x60] sm:$0xff]
        %v310 = vld [vmem:[#allocation5 + $0x68] sm:$0xff]
        %v311 = vld [vmem:[#allocation5 + $0x70] sm:$0xff]
        %v312 = vld [vmem:[#allocation5 + $0x78] sm:$0xff]
        %v313 = vld [vmem:[#allocation5 + $0x80] sm:$0xff]
        %v314 = vld [vmem:[#allocation5 + $0x88] sm:$0xff]
        %v315 = vld [vmem:[#allocation5 + $0x90] sm:$0xff]
        %v316 = vld [vmem:[#allocation5 + $0x98] sm:$0xff]
        %v317 = vld [vmem:[#allocation5 + $0xa0] sm:$0xff]
        %v318 = vld [vmem:[#allocation5 + $0xa8] sm:$0xff]
        %v319 = vld [vmem:[#allocation5 + $0xb0] sm:$0xff]
        %v320 = vld [vmem:[#allocation5 + $0xb8] sm:$0xff]
        %v321 = vld [vmem:[#allocation5 + $0xc0] sm:$0xff]
        %v322 = vld [vmem:[#allocation5 + $0xc8] sm:$0xff]
        %v323 = vld [vmem:[#allocation5 + $0xd0] sm:$0xff]
        %v324 = vld [vmem:[#allocation5 + $0xd8] sm:$0xff]
        %v325 = vld [vmem:[#allocation5 + $0xe0] sm:$0xff]
        %v326 = vld [vmem:[#allocation5 + $0xe8] sm:$0xff]
        %v327 = vld [vmem:[#allocation5 + $0xf0] sm:$0xff]
        %v328 = vld [vmem:[#allocation5 + $0xf8] sm:$0xff]
        %v331 = vunpack.c.l.b16 %v295
        %v332 = vunpack.c.l.b16 %v296
        %v333 = vpack.c.b16 %v332, %v331
        %v367 = vunpack.c.l.b16 %v297
        %v368 = vunpack.c.h.b16 %v297
        %v369 = vunpack.c.l.b16 %v298
        %v370 = vunpack.c.h.b16 %v298
        %v371 = vunpack.c.l.b16 %v299
        %v372 = vunpack.c.h.b16 %v299
        %v373 = vunpack.c.l.b16 %v300
        %v374 = vunpack.c.h.b16 %v300
        %v375 = vunpack.c.l.b16 %v301
        %v376 = vunpack.c.h.b16 %v301
        %v377 = vunpack.c.l.b16 %v302
        %v378 = vunpack.c.h.b16 %v302
        %v379 = vunpack.c.l.b16 %v303
        %v380 = vunpack.c.h.b16 %v303
        %v381 = vunpack.c.l.b16 %v304
        %v382 = vunpack.c.h.b16 %v304
        %v383 = vunpack.c.l.b16 %v305
        %v384 = vunpack.c.h.b16 %v305
        %v385 = vunpack.c.l.b16 %v306
        %v386 = vunpack.c.h.b16 %v306
        %v387 = vunpack.c.l.b16 %v307
        %v388 = vunpack.c.h.b16 %v307
        %v389 = vunpack.c.l.b16 %v308
        %v390 = vunpack.c.h.b16 %v308
        %v391 = vunpack.c.l.b16 %v309
        %v392 = vunpack.c.h.b16 %v309
        %v393 = vunpack.c.l.b16 %v310
        %v394 = vunpack.c.h.b16 %v310
        %v395 = vunpack.c.l.b16 %v311
        %v396 = vunpack.c.h.b16 %v311
        %v397 = vunpack.c.l.b16 %v312
        %v398 = vunpack.c.h.b16 %v312
        %v399 = vunpack.c.l.b16 %v313
        %v400 = vunpack.c.h.b16 %v313
        %v401 = vunpack.c.l.b16 %v314
        %v402 = vunpack.c.h.b16 %v314
        %v403 = vunpack.c.l.b16 %v315
        %v404 = vunpack.c.h.b16 %v315
        %v405 = vunpack.c.l.b16 %v316
        %v406 = vunpack.c.h.b16 %v316
        %v407 = vunpack.c.l.b16 %v317
        %v408 = vunpack.c.h.b16 %v317
        %v409 = vunpack.c.l.b16 %v318
        %v410 = vunpack.c.h.b16 %v318
        %v411 = vunpack.c.l.b16 %v319
        %v412 = vunpack.c.h.b16 %v319
        %v413 = vunpack.c.l.b16 %v320
        %v414 = vunpack.c.h.b16 %v320
        %v415 = vunpack.c.l.b16 %v321
        %v416 = vunpack.c.h.b16 %v321
        %v417 = vunpack.c.l.b16 %v322
        %v418 = vunpack.c.h.b16 %v322
        %v419 = vunpack.c.l.b16 %v323
        %v420 = vunpack.c.h.b16 %v323
        %v421 = vunpack.c.l.b16 %v324
        %v422 = vunpack.c.h.b16 %v324
        %v423 = vunpack.c.l.b16 %v325
        %v424 = vunpack.c.h.b16 %v325
        %v425 = vunpack.c.l.b16 %v326
        %v426 = vunpack.c.h.b16 %v326
        %v427 = vunpack.c.l.b16 %v327
        %v428 = vunpack.c.h.b16 %v327
        %v429 = vunpack.c.l.b16 %v328
        %v430 = vunpack.c.h.b16 %v328
        %v431 = vpack.c.b16 %v371, %v367
        %v432 = vpack.c.b16 %v372, %v368
        %v433 = vpack.c.b16 %v373, %v369
        %v434 = vpack.c.b16 %v374, %v370
        %v435 = vpack.c.b16 %v379, %v375
        %v436 = vpack.c.b16 %v380, %v376
        %v437 = vpack.c.b16 %v381, %v377
        %v438 = vpack.c.b16 %v382, %v378
        %v439 = vpack.c.b16 %v387, %v383
        %v440 = vpack.c.b16 %v388, %v384
        %v441 = vpack.c.b16 %v389, %v385
        %v442 = vpack.c.b16 %v390, %v386
        %v443 = vpack.c.b16 %v395, %v391
        %v444 = vpack.c.b16 %v396, %v392
        %v445 = vpack.c.b16 %v397, %v393
        %v446 = vpack.c.b16 %v398, %v394
        %v447 = vpack.c.b16 %v403, %v399
        %v448 = vpack.c.b16 %v404, %v400
        %v449 = vpack.c.b16 %v405, %v401
        %v450 = vpack.c.b16 %v406, %v402
        %v451 = vpack.c.b16 %v411, %v407
        %v452 = vpack.c.b16 %v412, %v408
        %v453 = vpack.c.b16 %v413, %v409
        %v454 = vpack.c.b16 %v414, %v410
        %v455 = vpack.c.b16 %v419, %v415
        %v456 = vpack.c.b16 %v420, %v416
        %v457 = vpack.c.b16 %v421, %v417
        %v458 = vpack.c.b16 %v422, %v418
        %v459 = vpack.c.b16 %v427, %v423
        %v460 = vpack.c.b16 %v428, %v424
        %v461 = vpack.c.b16 %v429, %v425
        %v462 = vpack.c.b16 %v430, %v426
        %495 = vmatpush.bf16.msra.mxu0 %v459
        %496 = vmatpush.bf16.msra.mxu0 %v455
        %497 = vmatpush.bf16.msra.mxu0 %v451
        %498 = vmatpush.bf16.msra.mxu0 %v447
        %499 = vmatpush.bf16.msra.mxu0 %v443
        %500 = vmatpush.bf16.msra.mxu0 %v439
        %501 = vmatpush.bf16.msra.mxu0 %v435
        %502 = vmatpush.bf16.msra.mxu0 %v431
        %503 = vmatmul.bf16.gmra.mxu0 %v333
        %v504 = vpop.f32.mrf.mxu0
        %v505 = vadd.f32 0.0, %v504
        %v506 = vpop.f32.mrf.mxu0
        %v507 = vadd.f32 0.0, %v506
        %508 = vdwg.mxu0
        %509 = vmatpush.bf16.msra.mxu0 %v460
        %510 = vmatpush.bf16.msra.mxu0 %v456
        %511 = vmatpush.bf16.msra.mxu0 %v452
        %512 = vmatpush.bf16.msra.mxu0 %v448
        %513 = vmatpush.bf16.msra.mxu0 %v444
        %514 = vmatpush.bf16.msra.mxu0 %v440
        %515 = vmatpush.bf16.msra.mxu0 %v436
        %516 = vmatpush.bf16.msra.mxu0 %v432
        %517 = vmatmul.bf16.gmra.mxu0 %v333
        %v518 = vpop.f32.mrf.mxu0
        %v519 = vadd.f32 0.0, %v518
        %v520 = vpop.f32.mrf.mxu0
        %v521 = vadd.f32 0.0, %v520
        %522 = vdwg.mxu0
        %523 = vmatpush.bf16.msra.mxu0 %v461
        %524 = vmatpush.bf16.msra.mxu0 %v457
        %525 = vmatpush.bf16.msra.mxu0 %v453
        %526 = vmatpush.bf16.msra.mxu0 %v449
        %527 = vmatpush.bf16.msra.mxu0 %v445
        %528 = vmatpush.bf16.msra.mxu0 %v441
        %529 = vmatpush.bf16.msra.mxu0 %v437
        %530 = vmatpush.bf16.msra.mxu0 %v433
        %531 = vmatmul.bf16.gmra.mxu0 %v333
        %v532 = vpop.f32.mrf.mxu0
        %v533 = vadd.f32 0.0, %v532
        %v534 = vpop.f32.mrf.mxu0
        %v535 = vadd.f32 0.0, %v534
        %536 = vdwg.mxu0
        %537 = vmatpush.bf16.msra.mxu0 %v462
        %538 = vmatpush.bf16.msra.mxu0 %v458
        %539 = vmatpush.bf16.msra.mxu0 %v454
        %540 = vmatpush.bf16.msra.mxu0 %v450
        %541 = vmatpush.bf16.msra.mxu0 %v446
        %542 = vmatpush.bf16.msra.mxu0 %v442
        %543 = vmatpush.bf16.msra.mxu0 %v438
        %544 = vmatpush.bf16.msra.mxu0 %v434
        %545 = vmatmul.bf16.gmra.mxu0 %v333
        %v546 = vpop.f32.mrf.mxu0
        %v547 = vadd.f32 0.0, %v546
        %v548 = vpop.f32.mrf.mxu0
        %v549 = vadd.f32 0.0, %v548
        %550 = vdwg.mxu0
        %v551 = vrot.slane %v519, 1
        %v552 = vrot.slane %v521, 1
        %v553 = vlaneseq
        %v554 = vshrl.u32 %v553, 7
        %vm555 = vcmp.lt.s32.totalorder %v554, 7
        %v556 = vsel %vm555, %v551, %v552
        %v557 = vsel %vm555, %v552, %v551
        %v558 = vadd.f32 %v505, %v556
        %v559 = vadd.f32 %v507, %v557
        %v560 = vrot.slane %v533, 2
        %v561 = vrot.slane %v535, 2
        %vm562 = vcmp.lt.s32.totalorder %v554, 6
        %v563 = vsel %vm562, %v560, %v561
        %v564 = vsel %vm562, %v561, %v560
        %v565 = vadd.f32 %v558, %v563
        %v566 = vadd.f32 %v559, %v564
        %v567 = vrot.slane %v547, 3
        %v568 = vrot.slane %v549, 3
        %vm569 = vcmp.lt.s32.totalorder %v554, 5
        %v570 = vsel %vm569, %v567, %v568
        %v571 = vsel %vm569, %v568, %v567
        %v572 = vadd.f32 %v565, %v570
        %v573 = vadd.f32 %v566, %v571
        %v574 = vld [vmem:[#allocation7] sm:$0xff]
        %v575 = vld [vmem:[#allocation7 + $0x8] sm:$0xff]
        %v576 = vadd.f32 %v572, %v574
        %v577 = vadd.f32 %v573, %v575
        %v578 = vmax.f32 %v576, 0.0
        %v579 = vmax.f32 %v577, 0.0
        %v580 = vmax.f32 %v578, %v579
        %v581 = vrot.slane %v580, 4
        %v582 = vmax.f32 %v580, %v581
        %v583 = vrot.slane %v582, 2
        %v584 = vmax.f32 %v582, %v583
        %v585 = vrot.slane %v584, 1
        %v586 = vmax.f32 %v584, %v585
        %v587 = vpack.c.bf16 %v586, %v586
        %v588 = vld [vmem:[#allocation8] sm:$0xf]
        %v589 = vld [vmem:[#allocation8 + $0x4] sm:$0xf]
        %v590 = vld [vmem:[#allocation8 + $0x8] sm:$0xf]
        %v591 = vld [vmem:[#allocation8 + $0xc] sm:$0xf]
        %v592 = vld [vmem:[#allocation8 + $0x10] sm:$0xf]
        %v593 = vld [vmem:[#allocation8 + $0x14] sm:$0xf]
        %v594 = vld [vmem:[#allocation8 + $0x18] sm:$0xf]
        %v595 = vld [vmem:[#allocation8 + $0x1c] sm:$0xf]
        %v596 = vld [vmem:[#allocation8 + $0x20] sm:$0xf]
        %v597 = vld [vmem:[#allocation8 + $0x24] sm:$0xf]
        %v598 = vld [vmem:[#allocation8 + $0x28] sm:$0xf]
        %v599 = vld [vmem:[#allocation8 + $0x2c] sm:$0xf]
        %v600 = vld [vmem:[#allocation8 + $0x30] sm:$0xf]
        %v601 = vld [vmem:[#allocation8 + $0x34] sm:$0xf]
        %v602 = vld [vmem:[#allocation8 + $0x38] sm:$0xf]
        %v603 = vld [vmem:[#allocation8 + $0x3c] sm:$0xf]
        %v604 = vld [vmem:[%s4] sm:$0x1]
        %v621 = vunpack.c.l.b16 %v588
        %v622 = vunpack.c.l.b16 %v589
        %v623 = vunpack.c.l.b16 %v590
        %v624 = vunpack.c.l.b16 %v591
        %v625 = vunpack.c.l.b16 %v592
        %v626 = vunpack.c.l.b16 %v593
        %v627 = vunpack.c.l.b16 %v594
        %v628 = vunpack.c.l.b16 %v595
        %v629 = vunpack.c.l.b16 %v596
        %v630 = vunpack.c.l.b16 %v597
        %v631 = vunpack.c.l.b16 %v598
        %v632 = vunpack.c.l.b16 %v599
        %v633 = vunpack.c.l.b16 %v600
        %v634 = vunpack.c.l.b16 %v601
        %v635 = vunpack.c.l.b16 %v602
        %v636 = vunpack.c.l.b16 %v603
        %v637 = vpack.c.b16 %v622, %v621
        %v638 = vpack.c.b16 %v624, %v623
        %v639 = vpack.c.b16 %v626, %v625
        %v640 = vpack.c.b16 %v628, %v627
        %v641 = vpack.c.b16 %v630, %v629
        %v642 = vpack.c.b16 %v632, %v631
        %v643 = vpack.c.b16 %v634, %v633
        %v644 = vpack.c.b16 %v636, %v635
        %653 = vmatpush.bf16.msra.mxu0 %v644
        %654 = vmatpush.bf16.msra.mxu0 %v643
        %655 = vmatpush.bf16.msra.mxu0 %v642
        %656 = vmatpush.bf16.msra.mxu0 %v641
        %657 = vmatpush.bf16.msra.mxu0 %v640
        %658 = vmatpush.bf16.msra.mxu0 %v639
        %659 = vmatpush.bf16.msra.mxu0 %v638
        %660 = vmatpush.bf16.msra.mxu0 %v637
        %661 = vmatmul.bf16.gmra.mxu0 %v587
        %v662 = vpop.f32.mrf.mxu0
        %v663 = vadd.f32 %v604, %v662
        %v664 = vpop.f32.mrf.mxu0
        %665 = vdwg.mxu0
        %666 = vst [vmem:[%s293] sm:$0x1] %v663
        %s667 = sand.u32 %s142, 1
        %s668 = scalar_lea.sflag [#allocation4], %s667
        %s669 = sand.u32 %s142, 1
        %s670 = scalar_lea.vmem [#allocation10], %s669
        // Predicated region
        $region57: #{tpu_custom_call.1} parent=39 // pred_check
          %p671 = pneg %p152
        $region58: #{tpu_custom_call.1} parent=39 // pred_check_branch
          %673 = sbr.rel (%p671) target = $region60
        $region59: #{tpu_custom_call.1} parent=39 // pred_region
          %675 = vsyncadd %s668, 0
          %s676 = scalar_lea.hbm %s5, %s24
          %s678 = sshll.u32 %s670, 4
          %s679 = int_to_ptr.vmem [resolvable:$true] %s678
          %s680 = sshll.u32 %s676, 4
          %s681 = int_to_ptr.hbm [resolvable:$true] %s680
          %683 = dma.vmem_to_hbm [thread:$0]  %s679, 16, %s681, %s668
        $region60: #{tpu_custom_call.1} parent=39 // pred_fallthru
          _
      $region40: #{tpu_custom_call.1} parent=5 // pred_fallthru
        _
      %p684 = scmp.le.s32.totalorder 2, %s19
      // Predicated region
      $region61: #{tpu_custom_call.1} parent=5 // pred_check
        %p685 = pneg %p684
      $region62: #{tpu_custom_call.1} parent=5 // pred_check_branch
        %687 = sbr.rel (%p685) target = $region64
      $region63: #{tpu_custom_call.1} parent=5 // pred_region
        %s688 = ssub.s32 %s19, 2
        // Predicated region
        $region65: #{tpu_custom_call.1} parent=63 // pred_check
          %p689 = pneg %p158
        $region66: #{tpu_custom_call.1} parent=63 // pred_check_branch
          %691 = sbr.rel (%p689) target = $region68
        $region67: #{tpu_custom_call.1} parent=63 // pred_region
          %s692 = sand.u32 %s143, 1
          %s693 = scalar_lea.sflag [#allocation4], %s692
          %s694 = sand.u32 %s143, 1
          %s695 = scalar_lea.vmem [#allocation10], %s694
          %697 = dma.done %s693, 16
        $region68: #{tpu_custom_call.1} parent=63 // pred_fallthru
          _
      $region64: #{tpu_custom_call.1} parent=5 // pred_fallthru
        _
    $region6: #{tpu_custom_call.1} parent=1 // loop_footer
      %s23 = sadd.s32 1, %s19
    $region7: #{tpu_custom_call.1} parent=1 // loop_footer_branch
      %18 = sbr.rel target = $region3
    $region8: #{tpu_custom_call.1} parent=1 // loop_exit
      _
    %698 = vsyncpa [#allocation3], 1
    %s699 = scalar_lea.sflag [#allocation3], 1
    %700 = vsyncpa %s699, 1
    %701 = vsyncpa [#allocation6], 1
    %702 = vsyncpa [#allocation9], 1
    %703 = vsyncpa [#allocation4], 1
    %s704 = scalar_lea.sflag [#allocation4], 1
    %705 = vsyncpa %s704, 1

</llo_original>
